<compile_context>
chip_gen: v7x
topology: tpu7x:2x2x1
jax: 0.10.0
libtpu: 0.0.40
codegen_flags: <defaults>
</compile_context>

<pallas_src>
import functools
import math

import jax
import jax.numpy as jnp
from jax.experimental import pallas as pl
from jax.experimental.pallas import tpu as pltpu


def _round_up(x, m):
    return ((x + m - 1) // m) * m


# ----------------------------------------------------------------------------
# Pallas kernel: the whole trainable head, 5 small matmuls, VMEM-resident,
# all activation slices 128-lane aligned.
# ----------------------------------------------------------------------------
def threeway_kernel(gpad,
                    l1_ref, l2_ref, l3_ref,
                    wf1_ref, wf2_ref, wf3_ref, bfold_ref,
                    wlstm_ref, blstm_ref, wfc_ref, bfc_ref,
                    out_ref):
    f32 = jnp.float32
    cdt = wlstm_ref.dtype        # compute dtype: bf16 on v6e/v7x, f32 on v5e

    # fc1/fc2/fc3 + Linear(3H->H) + Tanh, folded OFFLINE into three narrow
    # accumulating dots against pre-multiplied slabs plus one fused bias.
    pre = (jnp.dot(l1_ref[...], wf1_ref[...], preferred_element_type=f32)
           + jnp.dot(l2_ref[...], wf2_ref[...], preferred_element_type=f32)
           + jnp.dot(l3_ref[...], wf3_ref[...], preferred_element_type=f32)
           + bfold_ref[...])
    h = jnp.tanh(pre).astype(cdt)                              # (bm, H)

    # Layer-0 bidirectional LSTM over a length-1 sequence, both directions in
    # one matmul.  Forget gate and W_hh dropped (h0 = c0 = 0).  Gate groups
    # are zero-padded to `gpad` (=128) lanes each:
    #   [ i_f|i_b|0 | g_f|g_b|0 | o_f|o_b|0 ]
    # so every slice below starts on a 128-lane boundary (no XLU relayouts).
    gates = (jnp.dot(h, wlstm_ref[...], preferred_element_type=f32)
             + blstm_ref[...]).astype(cdt)                     # (bm, 3*gpad)
    i = jax.nn.sigmoid(gates[:, 0 * gpad:1 * gpad])
    g = jnp.tanh(gates[:, 1 * gpad:2 * gpad])
    o = jax.nn.sigmoid(gates[:, 2 * gpad:3 * gpad])
    hid = o * jnp.tanh(i * g)        # (bm, gpad); lanes 2H..gpad are exactly 0

    # Final fc.  wfc is zero-padded to (gpad, out_pad): the pad rows kill any
    # contribution from the padded lanes of `hid`, and the 128-wide store is
    # lane-dense.
    out_ref[...] = (jnp.dot(hid, wfc_ref[...], preferred_element_type=f32)
                    + bfc_ref[...])


# ----------------------------------------------------------------------------
# Wrapper
# ----------------------------------------------------------------------------
def threeway_forward(logits1, logits2, logits3, kp, *, block_b=2048):
    B = logits1.shape[0]
    H = kp["H"]
    GPAD = kp["GPAD"]
    out_pad = kp["out_pad"]
    num_labels = kp["num_labels"]

    def _f32(x):
        return x if x.dtype == jnp.float32 else x.astype(jnp.float32)

    l1, l2, l3 = _f32(logits1), _f32(logits2), _f32(logits3)
    K = l1.shape[1] + l2.shape[1] + l3.shape[1]

    # Batch tiling.  Rows are independent, so the ragged last block is handled
    # by Pallas' masked boundary writes (no padding of the inputs).
    #   * tiny B: one full-extent block.
    #   * otherwise: tile is a multiple of 8, capped at block_b, and chosen so
    #     the grid has >= 2 steps (v7x megacore sharding via "parallel").
    if B <= 8:
        bm = B
    else:
        bm = min(block_b, _round_up(pl.cdiv(B, 2), 8))
    nb = pl.cdiv(B, bm)

    def full(shape):
        # Constant index_map: weights/biases stay VMEM-resident across steps.
        return pl.BlockSpec(shape, lambda i: (0, 0))

    grid_spec = pltpu.PrefetchScalarGridSpec(
        num_scalar_prefetch=0,
        grid=(nb,),
        in_specs=[
            pl.BlockSpec((bm, l1.shape[1]), lambda i: (i, 0)),
            pl.BlockSpec((bm, l2.shape[1]), lambda i: (i, 0)),
            pl.BlockSpec((bm, l3.shape[1]), lambda i: (i, 0)),
            full(kp["wf1"].shape), full(kp["wf2"].shape), full(kp["wf3"].shape),
            full(kp["bfold"].shape),
            full(kp["wlstm"].shape), full(kp["blstm"].shape),
            full(kp["wfc"].shape), full(kp["bfc"].shape),
        ],
        out_specs=pl.BlockSpec((bm, out_pad), lambda i: (i, 0)),
    )

    # Advisory cost estimate so XLA overlaps this tiny head with other work.
    param_keys = ("wf1", "wf2", "wf3", "bfold", "wlstm", "blstm", "wfc", "bfc")
    w_bytes = sum(int(kp[k].size) * kp[k].dtype.itemsize for k in param_keys)
    cost = pl.CostEstimate(
        flops=int(2 * B * (K * H + H * 3 * GPAD + GPAD * out_pad)),
        transcendentals=int(B * (H + 4 * GPAD)),
        bytes_accessed=int(B * (K + out_pad) * 4) + w_bytes,
    )

    out = pl.pallas_call(
        functools.partial(threeway_kernel, GPAD),
        out_shape=jax.ShapeDtypeStruct((B, out_pad), jnp.float32),
        grid_spec=grid_spec,
        compiler_params=pltpu.CompilerParams(
            dimension_semantics=("parallel",),
            vmem_limit_bytes=48 * 1024 * 1024),
        cost_estimate=cost,
    )(l1, l2, l3,
      kp["wf1"], kp["wf2"], kp["wf3"], kp["bfold"],
      kp["wlstm"], kp["blstm"], kp["wfc"], kp["bfc"])

    return out[:, :num_labels]


# ----------------------------------------------------------------------------
# Raw parameter construction (shapes from the module's __init__).
# Linear weights are stored transposed as (in_features, out_features).
# ----------------------------------------------------------------------------
def init_raw_params(key, H=32, num_labels=30):
    keys = iter(jax.random.split(key, 64))

    def uniform(shape, scale):
        return jax.random.uniform(next(keys), shape, jnp.float32, -scale, scale)

    def linear(fan_in, fan_out):
        s = 1.0 / math.sqrt(fan_in)
        return uniform((fan_in, fan_out), s), uniform((1, fan_out), s)

    def lstm_dir(in_size):
        # PyTorch weight_ih is (4H, in) with gate order [i, f, g, o]; stored
        # here transposed.  h0 = c0 = 0 over a length-1 sequence makes W_hh
        # exactly zero, so it is omitted; biases are pre-summed (b_ih + b_hh).
        s = 1.0 / math.sqrt(H)
        w_ih = uniform((in_size, 4 * H), s)
        b_ih = uniform((1, 4 * H), s)
        b_hh = uniform((1, 4 * H), s)
        return w_ih, b_ih + b_hh

    w1, b1 = linear(2, H)            # fc1: Linear(2, H)
    w2, b2 = linear(29, H)           # fc2: Linear(29, H)
    w3, b3 = linear(30, H)           # fc3: Linear(30, H)
    wl, bl = linear(3 * H, H)        # linear[0]: Linear(3H, H)
    wih0f, bg0f = lstm_dir(H)        # LSTM layer 0, forward
    wih0b, bg0b = lstm_dir(H)        # LSTM layer 0, reverse
    # LSTM layer 1 (fwd/bwd) weights exist in the module but never reach the
    # output (only last_hidden[0], last_hidden[1] are used) -> not generated.
    wfc, bfc = linear(2 * H, num_labels)   # fc: Linear(2H, num_labels)

    return dict(H=H, num_labels=num_labels,
                w1=w1, b1=b1, w2=w2, b2=b2, w3=w3, b3=b3,
                wl=wl, bl=bl,
                wih0f=wih0f, bg0f=bg0f, wih0b=wih0b, bg0b=bg0b,
                wfc=wfc, bfc=bfc)


# ----------------------------------------------------------------------------
# Offline folding of the raw parameters into the packed kernel parameters.
# compute_dtype: bf16 recommended on v6e/v7x, f32 on v5e.
# ----------------------------------------------------------------------------
def fold_params(p, *, compute_dtype=jnp.float32, out_pad=128):
    H = p["H"]
    wl, bl = p["wl"], p["bl"]

    # fc1/fc2/fc3 each folded with its slab of Linear(3H->H):
    #   out = l1 @ wf1 + l2 @ wf2 + l3 @ wf3 + bfold
    wf1 = p["w1"] @ wl[0 * H:1 * H]                              # (2, H)
    wf2 = p["w2"] @ wl[1 * H:2 * H]                              # (29, H)
    wf3 = p["w3"] @ wl[2 * H:3 * H]                              # (30, H)
    bfold = (p["b1"] @ wl[0 * H:1 * H]
             + p["b2"] @ wl[1 * H:2 * H]
             + p["b3"] @ wl[2 * H:3 * H]
             + bl)                                               # (1, H)

    # Layer-0 LSTM, both directions, forget gate stripped (c0 == 0), W_hh
    # stripped (h0 == 0).  Gate groups [i_f|i_b], [g_f|g_b], [o_f|o_b] are
    # each zero-padded to GPAD = round_up(2H, 128) lanes so in-kernel slices
    # are 128-lane aligned.
    GPAD = _round_up(2 * H, 128)

    def pick(w):  # (rows, 4H) -> i, g, o columns
        return w[:, 0 * H:1 * H], w[:, 2 * H:3 * H], w[:, 3 * H:4 * H]

    i_f, g_f, o_f = pick(p["wih0f"])
    i_b, g_b, o_b = pick(p["wih0b"])
    bi_f, bg_f, bo_f = pick(p["bg0f"])
    bi_b, bg_b, bo_b = pick(p["bg0b"])

    def grp(a, b):  # (rows, H) + (rows, H) -> (rows, GPAD), zero pad on lanes
        cat = jnp.concatenate([a, b], axis=1)
        return jnp.pad(cat, ((0, 0), (0, GPAD - 2 * H)))

    wlstm = jnp.concatenate([grp(i_f, i_b), grp(g_f, g_b), grp(o_f, o_b)],
                            axis=1)                              # (H, 3*GPAD)
    blstm = jnp.concatenate([grp(bi_f, bi_b), grp(bg_f, bg_b), grp(bo_f, bo_b)],
                            axis=1)                              # (1, 3*GPAD)

    # Final fc: rows padded from 2H to GPAD (hidden pad lanes are zero anyway)
    # and columns zero-padded to a lane-dense width.
    num_labels = p["num_labels"]
    wfc = jnp.pad(p["wfc"], ((0, GPAD - 2 * H), (0, out_pad - num_labels)))
    bfc = jnp.pad(p["bfc"], ((0, 0), (0, out_pad - num_labels)))

    return dict(H=H, GPAD=GPAD, num_labels=num_labels, out_pad=out_pad,
                wf1=wf1, wf2=wf2, wf3=wf3, bfold=bfold,
                wlstm=wlstm.astype(compute_dtype), blstm=blstm,
                wfc=wfc.astype(compute_dtype), bfc=bfc)


# ----------------------------------------------------------------------------
# Pure-JAX reference (unfolded math, mirrors the torch forward) for checking.
# ----------------------------------------------------------------------------
def reference_forward(l1, l2, l3, p):
    H = p["H"]
    h1 = l1 @ p["w1"] + p["b1"]
    h2 = l2 @ p["w2"] + p["b2"]
    h3 = l3 @ p["w3"] + p["b3"]
    out = jnp.tanh(jnp.concatenate([h1, h2, h3], -1) @ p["wl"] + p["bl"])

    def cell(x, w, b):
        g = x @ w + b
        i = jax.nn.sigmoid(g[:, :H])
        gg = jnp.tanh(g[:, 2 * H:3 * H])
        o = jax.nn.sigmoid(g[:, 3 * H:])
        return o * jnp.tanh(i * gg)            # f * c0 term is zero

    hf0 = cell(out, p["wih0f"], p["bg0f"])     # last_hidden[0]
    hb0 = cell(out, p["wih0b"], p["bg0b"])     # last_hidden[1]
    cat = jnp.concatenate([hf0, hb0], -1)
    return cat @ p["wfc"] + p["bfc"]


if __name__ == "__main__":
    B, H, NUM_LABELS = 2, 32, 30
    key = jax.random.PRNGKey(0)
    k_in1, k_in2, k_in3, k_params, k_big = jax.random.split(key, 5)

    # Stand-ins for the three frozen roberta classification heads' logits.
    logits1 = jax.random.normal(k_in1, (B, 2), jnp.float32)
    logits2 = jax.random.normal(k_in2, (B, 29), jnp.float32)
    logits3 = jax.random.normal(k_in3, (B, 30), jnp.float32)

    raw = init_raw_params(k_params, H=H, num_labels=NUM_LABELS)

    # f32 path (use on v5e; tight tolerance).
    packed_f32 = fold_params(raw, compute_dtype=jnp.float32)
    out = threeway_forward(logits1, logits2, logits3, packed_f32)
    out = jax.block_until_ready(out)
    ref = reference_forward(logits1, logits2, logits3, raw)
    assert out.shape == (B, NUM_LABELS)
    assert jnp.allclose(out, ref, atol=1e-5, rtol=1e-5)

    # Multi-block grid path (>=2 grid steps, ragged last block via masked
    # boundary writes) — still small.
    Bb = 24
    kb1, kb2, kb3 = jax.random.split(k_big, 3)
    bl1 = jax.random.normal(kb1, (Bb, 2), jnp.float32)
    bl2 = jax.random.normal(kb2, (Bb, 29), jnp.float32)
    bl3 = jax.random.normal(kb3, (Bb, 30), jnp.float32)
    out_b = jax.block_until_ready(threeway_forward(bl1, bl2, bl3, packed_f32))
    ref_b = reference_forward(bl1, bl2, bl3, raw)
    assert out_b.shape == (Bb, NUM_LABELS)
    assert jnp.allclose(out_b, ref_b, atol=1e-5, rtol=1e-5)

    # bf16 activation path (recommended on v6e/v7x; looser tolerance).
    packed_bf16 = fold_params(raw, compute_dtype=jnp.bfloat16)
    out_bf16 = jax.block_until_ready(
        threeway_forward(logits1, logits2, logits3, packed_bf16))
    assert out_bf16.shape == (B, NUM_LABELS)
    assert jnp.allclose(out_bf16, ref, atol=5e-2, rtol=5e-2)

    print("KERNEL_OK")
</pallas_src>

<mosaic_0001>
module attributes {stable_mosaic.version = 11 : i64} {
  func.func @threeway_kernel(%arg0: i32, %arg1: memref<2x2xf32, #tpu.memory_space<vmem>>, %arg2: memref<2x29xf32, #tpu.memory_space<vmem>>, %arg3: memref<2x30xf32, #tpu.memory_space<vmem>>, %arg4: memref<2x32xf32, #tpu.memory_space<vmem>>, %arg5: memref<29x32xf32, #tpu.memory_space<vmem>>, %arg6: memref<30x32xf32, #tpu.memory_space<vmem>>, %arg7: memref<1x32xf32, #tpu.memory_space<vmem>>, %arg8: memref<32x384xf32, #tpu.memory_space<vmem>>, %arg9: memref<1x384xf32, #tpu.memory_space<vmem>>, %arg10: memref<128x128xf32, #tpu.memory_space<vmem>>, %arg11: memref<1x128xf32, #tpu.memory_space<vmem>>, %arg12: memref<2x128xf32, #tpu.memory_space<vmem>>) attributes {dimension_semantics = [#tpu.dimension_semantics<parallel>], iteration_bounds = array<i64: 1>, scalar_prefetch = 0 : i64, scratch_operands = 0 : i64, tpu.core_type = #tpu.core_type<tc>, window_params = [{transform_indices = @transform_0, window_bounds = array<i64: 2, 2>}, {transform_indices = @transform_1, window_bounds = array<i64: 2, 29>}, {transform_indices = @transform_2, window_bounds = array<i64: 2, 30>}, {pipeline_mode = #tpu.pipeline_mode<synchronous>, transform_indices = @transform_3, window_bounds = array<i64: 2, 32>}, {pipeline_mode = #tpu.pipeline_mode<synchronous>, transform_indices = @transform_4, window_bounds = array<i64: 29, 32>}, {pipeline_mode = #tpu.pipeline_mode<synchronous>, transform_indices = @transform_5, window_bounds = array<i64: 30, 32>}, {pipeline_mode = #tpu.pipeline_mode<synchronous>, transform_indices = @transform_6, window_bounds = array<i64: 1, 32>}, {pipeline_mode = #tpu.pipeline_mode<synchronous>, transform_indices = @transform_7, window_bounds = array<i64: 32, 384>}, {pipeline_mode = #tpu.pipeline_mode<synchronous>, transform_indices = @transform_8, window_bounds = array<i64: 1, 384>}, {pipeline_mode = #tpu.pipeline_mode<synchronous>, transform_indices = @transform_9, window_bounds = array<i64: 128, 128>}, {pipeline_mode = #tpu.pipeline_mode<synchronous>, transform_indices = @transform_10, window_bounds = array<i64: 1, 128>}, {transform_indices = @transform_11, window_bounds = array<i64: 2, 128>}]} {
    %c0 = arith.constant 0 : index
    %c0_0 = arith.constant 0 : index
    %0 = vector.load %arg1[%c0, %c0_0] : memref<2x2xf32, #tpu.memory_space<vmem>>, vector<2x2xf32>
    %c0_1 = arith.constant 0 : index
    %c0_2 = arith.constant 0 : index
    %1 = vector.load %arg4[%c0_1, %c0_2] : memref<2x32xf32, #tpu.memory_space<vmem>>, vector<2x32xf32>
    %cst = arith.constant dense<0.000000e+00> : vector<2x32xf32>
    %2 = tpu.matmul %0, %1, %cst {dimension_numbers = #tpu.dot_dimension_numbers<[1], [0], [0], [1], [0, 0, 1, 1], [], []>} : vector<2x2xf32>, vector<2x32xf32>, vector<2x32xf32> -> vector<2x32xf32>
    %c0_3 = arith.constant 0 : index
    %c0_4 = arith.constant 0 : index
    %3 = vector.load %arg2[%c0_3, %c0_4] : memref<2x29xf32, #tpu.memory_space<vmem>>, vector<2x29xf32>
    %c0_5 = arith.constant 0 : index
    %c0_6 = arith.constant 0 : index
    %4 = vector.load %arg5[%c0_5, %c0_6] : memref<29x32xf32, #tpu.memory_space<vmem>>, vector<29x32xf32>
    %cst_7 = arith.constant dense<0.000000e+00> : vector<2x32xf32>
    %5 = tpu.matmul %3, %4, %cst_7 {dimension_numbers = #tpu.dot_dimension_numbers<[1], [0], [0], [1], [0, 0, 1, 1], [], []>} : vector<2x29xf32>, vector<29x32xf32>, vector<2x32xf32> -> vector<2x32xf32>
    %6 = arith.addf %2, %5 : vector<2x32xf32>
    %c0_8 = arith.constant 0 : index
    %c0_9 = arith.constant 0 : index
    %7 = vector.load %arg3[%c0_8, %c0_9] : memref<2x30xf32, #tpu.memory_space<vmem>>, vector<2x30xf32>
    %c0_10 = arith.constant 0 : index
    %c0_11 = arith.constant 0 : index
    %8 = vector.load %arg6[%c0_10, %c0_11] : memref<30x32xf32, #tpu.memory_space<vmem>>, vector<30x32xf32>
    %cst_12 = arith.constant dense<0.000000e+00> : vector<2x32xf32>
    %9 = tpu.matmul %7, %8, %cst_12 {dimension_numbers = #tpu.dot_dimension_numbers<[1], [0], [0], [1], [0, 0, 1, 1], [], []>} : vector<2x30xf32>, vector<30x32xf32>, vector<2x32xf32> -> vector<2x32xf32>
    %10 = arith.addf %6, %9 : vector<2x32xf32>
    %c0_13 = arith.constant 0 : index
    %c0_14 = arith.constant 0 : index
    %11 = vector.load %arg7[%c0_13, %c0_14] : memref<1x32xf32, #tpu.memory_space<vmem>>, vector<1x32xf32>
    %12 = vector.broadcast %11 : vector<1x32xf32> to vector<2x32xf32>
    %13 = arith.addf %10, %12 : vector<2x32xf32>
    %14 = math.tanh %13 : vector<2x32xf32>
    %c0_15 = arith.constant 0 : index
    %c0_16 = arith.constant 0 : index
    %15 = vector.load %arg8[%c0_15, %c0_16] : memref<32x384xf32, #tpu.memory_space<vmem>>, vector<32x384xf32>
    %cst_17 = arith.constant dense<0.000000e+00> : vector<2x384xf32>
    %16 = tpu.matmul %14, %15, %cst_17 {dimension_numbers = #tpu.dot_dimension_numbers<[1], [0], [0], [1], [0, 0, 1, 1], [], []>} : vector<2x32xf32>, vector<32x384xf32>, vector<2x384xf32> -> vector<2x384xf32>
    %c0_18 = arith.constant 0 : index
    %c0_19 = arith.constant 0 : index
    %17 = vector.load %arg9[%c0_18, %c0_19] : memref<1x384xf32, #tpu.memory_space<vmem>>, vector<1x384xf32>
    %18 = vector.broadcast %17 : vector<1x384xf32> to vector<2x384xf32>
    %19 = arith.addf %16, %18 : vector<2x384xf32>
    %20 = vector.extract_strided_slice %19 {offsets = [0, 0], sizes = [2, 128], strides = [1, 1]} : vector<2x384xf32> to vector<2x128xf32>
    %21 = arith.negf %20 : vector<2x128xf32>
    %22 = math.exp %21 : vector<2x128xf32>
    %cst_20 = arith.constant 1.000000e+00 : f32
    %23 = vector.broadcast %cst_20 : f32 to vector<2x128xf32>
    %24 = arith.addf %23, %22 : vector<2x128xf32>
    %25 = arith.divf %23, %24 : vector<2x128xf32>
    %26 = vector.extract_strided_slice %19 {offsets = [0, 128], sizes = [2, 128], strides = [1, 1]} : vector<2x384xf32> to vector<2x128xf32>
    %27 = math.tanh %26 : vector<2x128xf32>
    %28 = vector.extract_strided_slice %19 {offsets = [0, 256], sizes = [2, 128], strides = [1, 1]} : vector<2x384xf32> to vector<2x128xf32>
    %29 = arith.negf %28 : vector<2x128xf32>
    %30 = math.exp %29 : vector<2x128xf32>
    %cst_21 = arith.constant 1.000000e+00 : f32
    %31 = vector.broadcast %cst_21 : f32 to vector<2x128xf32>
    %32 = arith.addf %31, %30 : vector<2x128xf32>
    %33 = arith.divf %31, %32 : vector<2x128xf32>
    %34 = arith.mulf %25, %27 : vector<2x128xf32>
    %35 = math.tanh %34 : vector<2x128xf32>
    %36 = arith.mulf %33, %35 : vector<2x128xf32>
    %c0_22 = arith.constant 0 : index
    %c0_23 = arith.constant 0 : index
    %37 = vector.load %arg10[%c0_22, %c0_23] : memref<128x128xf32, #tpu.memory_space<vmem>>, vector<128x128xf32>
    %cst_24 = arith.constant dense<0.000000e+00> : vector<2x128xf32>
    %38 = tpu.matmul %36, %37, %cst_24 {dimension_numbers = #tpu.dot_dimension_numbers<[1], [0], [0], [1], [0, 0, 1, 1], [], []>} : vector<2x128xf32>, vector<128x128xf32>, vector<2x128xf32> -> vector<2x128xf32>
    %c0_25 = arith.constant 0 : index
    %c0_26 = arith.constant 0 : index
    %39 = vector.load %arg11[%c0_25, %c0_26] : memref<1x128xf32, #tpu.memory_space<vmem>>, vector<1x128xf32>
    %40 = vector.broadcast %39 : vector<1x128xf32> to vector<2x128xf32>
    %41 = arith.addf %38, %40 : vector<2x128xf32>
    %c0_27 = arith.constant 0 : index
    %c0_28 = arith.constant 0 : index
    %42 = vector.load %arg12[%c0_27, %c0_28] : memref<2x128xf32, #tpu.memory_space<vmem>>, vector<2x128xf32>
    tpu.vector_store %arg12[%c0_27, %c0_28], %41 {strides = array<i32>} : memref<2x128xf32, #tpu.memory_space<vmem>>, vector<2x128xf32>,
    return
  }
  func.func @transform_0(%arg0: i32) -> (i32, i32) {
    %c0_i32 = arith.constant 0 : i32
    %c0_i32_0 = arith.constant 0 : i32
    return %arg0, %c0_i32 : i32, i32
  }
  func.func @transform_1(%arg0: i32) -> (i32, i32) {
    %c0_i32 = arith.constant 0 : i32
    %c0_i32_0 = arith.constant 0 : i32
    return %arg0, %c0_i32 : i32, i32
  }
  func.func @transform_2(%arg0: i32) -> (i32, i32) {
    %c0_i32 = arith.constant 0 : i32
    %c0_i32_0 = arith.constant 0 : i32
    return %arg0, %c0_i32 : i32, i32
  }
  func.func @transform_3(%arg0: i32) -> (i32, i32) {
    %c0_i32 = arith.constant 0 : i32
    %c0_i32_0 = arith.constant 0 : i32
    %c0_i32_1 = arith.constant 0 : i32
    return %c0_i32, %c0_i32_0 : i32, i32
  }
  func.func @transform_4(%arg0: i32) -> (i32, i32) {
    %c0_i32 = arith.constant 0 : i32
    %c0_i32_0 = arith.constant 0 : i32
    %c0_i32_1 = arith.constant 0 : i32
    return %c0_i32, %c0_i32_0 : i32, i32
  }
  func.func @transform_5(%arg0: i32) -> (i32, i32) {
    %c0_i32 = arith.constant 0 : i32
    %c0_i32_0 = arith.constant 0 : i32
    %c0_i32_1 = arith.constant 0 : i32
    return %c0_i32, %c0_i32_0 : i32, i32
  }
  func.func @transform_6(%arg0: i32) -> (i32, i32) {
    %c0_i32 = arith.constant 0 : i32
    %c0_i32_0 = arith.constant 0 : i32
    %c0_i32_1 = arith.constant 0 : i32
    return %c0_i32, %c0_i32_0 : i32, i32
  }
  func.func @transform_7(%arg0: i32) -> (i32, i32) {
    %c0_i32 = arith.constant 0 : i32
    %c0_i32_0 = arith.constant 0 : i32
    %c0_i32_1 = arith.constant 0 : i32
    return %c0_i32, %c0_i32_0 : i32, i32
  }
  func.func @transform_8(%arg0: i32) -> (i32, i32) {
    %c0_i32 = arith.constant 0 : i32
    %c0_i32_0 = arith.constant 0 : i32
    %c0_i32_1 = arith.constant 0 : i32
    return %c0_i32, %c0_i32_0 : i32, i32
  }
  func.func @transform_9(%arg0: i32) -> (i32, i32) {
    %c0_i32 = arith.constant 0 : i32
    %c0_i32_0 = arith.constant 0 : i32
    %c0_i32_1 = arith.constant 0 : i32
    return %c0_i32, %c0_i32_0 : i32, i32
  }
  func.func @transform_10(%arg0: i32) -> (i32, i32) {
    %c0_i32 = arith.constant 0 : i32
    %c0_i32_0 = arith.constant 0 : i32
    %c0_i32_1 = arith.constant 0 : i32
    return %c0_i32, %c0_i32_0 : i32, i32
  }
  func.func @transform_11(%arg0: i32) -> (i32, i32) {
    %c0_i32 = arith.constant 0 : i32
    %c0_i32_0 = arith.constant 0 : i32
    return %arg0, %c0_i32 : i32, i32
  }
}

</mosaic_0001>

<llo_original>
// kernel: tpu_custom_call.1
$region0: #{tpu_custom_call.1}
  #allocation0 [shape = 'u32[]', space=smem, size = 0x4, offset = 0x4, fixed_abs, tag = 'smem constant byte address 0x4 - core index']
  #allocation1 [shape = 'u32[144,128]{1,0:T(1,128)}', space=vmem, size = 0x12000, scoped, tag = 'internal scratch']
  %s0 = inlined_call_operand.hbm [shape: f32[2,2], index: 0, kind: input, shape index: {}]
  %s1 = inlined_call_operand.vmem [shape: f32[2,29], index: 1, kind: input, shape index: {}]
  %s2 = inlined_call_operand.vmem [shape: f32[2,30], index: 2, kind: input, shape index: {}]
  %s3 = inlined_call_operand.vmem [shape: f32[2,32], index: 3, kind: input, shape index: {}]
  %s4 = inlined_call_operand.hbm [shape: f32[29,32], index: 4, kind: input, shape index: {}]
  %s5 = inlined_call_operand.hbm [shape: f32[30,32], index: 5, kind: input, shape index: {}]
  %s6 = inlined_call_operand.vmem [shape: f32[1,32], index: 6, kind: input, shape index: {}]
  %s7 = inlined_call_operand.hbm [shape: f32[32,384], index: 7, kind: input, shape index: {}]
  %s8 = inlined_call_operand.vmem [shape: f32[1,384], index: 8, kind: input, shape index: {}]
  %s9 = inlined_call_operand.hbm [shape: f32[128,128], index: 9, kind: input, shape index: {}]
  %s10 = inlined_call_operand.vmem [shape: f32[1,128], index: 10, kind: input, shape index: {}]
  %s11 = inlined_call_operand.hbm [shape: f32[2,128], index: 11, kind: output, shape index: {}]
  %s12 = sld [smem:[#allocation0]]
  $region74: #{tpu_custom_call.1} parent=0
    _
  %s14 = ssub.s32 1, %s12
  %s15 = scalar_select 0, %s14, %s12
  $region1: #{tpu_custom_call.1} parent=0
    #allocation2 [shape = 'u8[1024]{0}', space=vmem, size = 0x400, scoped, tag = 'input window, operand 0, single buffered']
    #allocation3 [shape = 's32[1]{0}', space=sflag, size = 0x4, scoped, tag = 'scoped memory for tpu_custom_call.1']
    #allocation4 [shape = 's32[1]{0}', space=sflag, size = 0x4, scoped, tag = 'scoped memory for tpu_custom_call.1']
    #allocation5 [shape = 'u8[16384]{0}', space=vmem, size = 0x4000, scoped, tag = 'input window, operand 4, single buffered']
    #allocation6 [shape = 's32[1]{0}', space=sflag, size = 0x4, scoped, tag = 'scoped memory for tpu_custom_call.1']
    #allocation7 [shape = 'u8[16384]{0}', space=vmem, size = 0x4000, scoped, tag = 'input window, operand 5, single buffered']
    #allocation8 [shape = 'u8[49152]{0}', space=vmem, size = 0xc000, scoped, tag = 'input window, operand 7, single buffered']
    #allocation9 [shape = 's32[1]{0}', space=sflag, size = 0x4, scoped, tag = 'scoped memory for tpu_custom_call.1']
    #allocation10 [shape = 'u8[65536]{0}', space=vmem, size = 0x10000, scoped, tag = 'input window, operand 9, single buffered']
    #allocation11 [shape = 'u8[1024]{0}', space=vmem, size = 0x400, scoped, tag = 'output window, operand 0, single buffered']
    %16 = vsyncpa [#allocation3], 0
    %17 = vsyncpa [#allocation6], 0
    %18 = vsyncpa [#allocation9], 0
    %19 = vsyncpa [#allocation4], 0
    // Predicated region
    $region2: #{tpu_custom_call.1} parent=1 // pred_check
      _
    $region3: #{tpu_custom_call.1} parent=1 // pred_check_branch
      %21 = sbr.rel (0) target = $region5
    $region4: #{tpu_custom_call.1} parent=1 // pred_region
      %s23 = ssub.s32 32, 32
      %24 = vsyncadd [#allocation3], %s23
      %s26 = sshll.u32 [#allocation2], 4
      %s27 = int_to_ptr.vmem [resolvable:$true] %s26
      %29 = dma.hbm_to_vmem [thread:$0]  %s0, 32, %s27, [#allocation3]
    $region5: #{tpu_custom_call.1} parent=1 // pred_fallthru
      _
    // Predicated region
    $region6: #{tpu_custom_call.1} parent=1 // pred_check
      _
    $region7: #{tpu_custom_call.1} parent=1 // pred_check_branch
      %31 = sbr.rel (0) target = $region9
    $region8: #{tpu_custom_call.1} parent=1 // pred_region
      _
    $region9: #{tpu_custom_call.1} parent=1 // pred_fallthru
      _
    // Predicated region
    $region10: #{tpu_custom_call.1} parent=1 // pred_check
      _
    $region11: #{tpu_custom_call.1} parent=1 // pred_check_branch
      %33 = sbr.rel (0) target = $region13
    $region12: #{tpu_custom_call.1} parent=1 // pred_region
      _
    $region13: #{tpu_custom_call.1} parent=1 // pred_fallthru
      _
    // Predicated region
    $region14: #{tpu_custom_call.1} parent=1 // pred_check
      _
    $region15: #{tpu_custom_call.1} parent=1 // pred_check_branch
      %35 = sbr.rel (0) target = $region17
    $region16: #{tpu_custom_call.1} parent=1 // pred_region
      _
    $region17: #{tpu_custom_call.1} parent=1 // pred_fallthru
      _
    // Predicated region
    $region18: #{tpu_custom_call.1} parent=1 // pred_check
      _
    $region19: #{tpu_custom_call.1} parent=1 // pred_check_branch
      %37 = sbr.rel (0) target = $region21
    $region20: #{tpu_custom_call.1} parent=1 // pred_region
      %s39 = ssub.s32 512, 512
      %40 = vsyncadd [#allocation6], %s39
      %s41 = sshll.u32 [#allocation5], 4
      %s42 = int_to_ptr.vmem [resolvable:$true] %s41
      %47 = dma.hbm_to_vmem [thread:$0]  %s4, 512, %s42, [#allocation6], 128, 128, 8
    $region21: #{tpu_custom_call.1} parent=1 // pred_fallthru
      _
    // Predicated region
    $region22: #{tpu_custom_call.1} parent=1 // pred_check
      _
    $region23: #{tpu_custom_call.1} parent=1 // pred_check_branch
      %49 = sbr.rel (0) target = $region25
    $region24: #{tpu_custom_call.1} parent=1 // pred_region
      %s51 = ssub.s32 512, 512
      %52 = vsyncadd [#allocation6], %s51
      %s53 = sshll.u32 [#allocation7], 4
      %s54 = int_to_ptr.vmem [resolvable:$true] %s53
      %59 = dma.hbm_to_vmem [thread:$0]  %s5, 512, %s54, [#allocation6], 128, 128, 8
    $region25: #{tpu_custom_call.1} parent=1 // pred_fallthru
      _
    // Predicated region
    $region26: #{tpu_custom_call.1} parent=1 // pred_check
      _
    $region27: #{tpu_custom_call.1} parent=1 // pred_check_branch
      %61 = sbr.rel (0) target = $region29
    $region28: #{tpu_custom_call.1} parent=1 // pred_region
      _
    $region29: #{tpu_custom_call.1} parent=1 // pred_fallthru
      _
    // Predicated region
    $region30: #{tpu_custom_call.1} parent=1 // pred_check
      _
    $region31: #{tpu_custom_call.1} parent=1 // pred_check_branch
      %63 = sbr.rel (0) target = $region33
    $region32: #{tpu_custom_call.1} parent=1 // pred_region
      %s65 = ssub.s32 1536, 1536
      %66 = vsyncadd [#allocation9], %s65
      %s67 = sshll.u32 [#allocation8], 4
      %s68 = int_to_ptr.vmem [resolvable:$true] %s67
      %73 = dma.hbm_to_vmem [thread:$0]  %s7, 1536, %s68, [#allocation9], 384, 384, 24
    $region33: #{tpu_custom_call.1} parent=1 // pred_fallthru
      _
    // Predicated region
    $region34: #{tpu_custom_call.1} parent=1 // pred_check
      _
    $region35: #{tpu_custom_call.1} parent=1 // pred_check_branch
      %75 = sbr.rel (0) target = $region37
    $region36: #{tpu_custom_call.1} parent=1 // pred_region
      _
    $region37: #{tpu_custom_call.1} parent=1 // pred_fallthru
      _
    // Predicated region
    $region38: #{tpu_custom_call.1} parent=1 // pred_check
      _
    $region39: #{tpu_custom_call.1} parent=1 // pred_check_branch
      %77 = sbr.rel (0) target = $region41
    $region40: #{tpu_custom_call.1} parent=1 // pred_region
      %s79 = ssub.s32 2048, 2048
      %80 = vsyncadd [#allocation9], %s79
      %s81 = sshll.u32 [#allocation10], 4
      %s82 = int_to_ptr.vmem [resolvable:$true] %s81
      %87 = dma.hbm_to_vmem [thread:$0]  %s9, 2048, %s82, [#allocation9], 128, 128, 8
    $region41: #{tpu_custom_call.1} parent=1 // pred_fallthru
      _
    // Predicated region
    $region42: #{tpu_custom_call.1} parent=1 // pred_check
      _
    $region43: #{tpu_custom_call.1} parent=1 // pred_check_branch
      %89 = sbr.rel (0) target = $region45
    $region44: #{tpu_custom_call.1} parent=1 // pred_region
      _
    $region45: #{tpu_custom_call.1} parent=1 // pred_fallthru
      _
    // Predicated region
    $region46: #{tpu_custom_call.1} parent=1 // pred_check
      _
    $region47: #{tpu_custom_call.1} parent=1 // pred_check_branch
      %91 = sbr.rel (0) target = $region49
    $region48: #{tpu_custom_call.1} parent=1 // pred_region
      %92 = dma.done [#allocation3], 32
    $region49: #{tpu_custom_call.1} parent=1 // pred_fallthru
      _
    // Predicated region
    $region50: #{tpu_custom_call.1} parent=1 // pred_check
      _
    $region51: #{tpu_custom_call.1} parent=1 // pred_check_branch
      %94 = sbr.rel (0) target = $region53
    $region52: #{tpu_custom_call.1} parent=1 // pred_region
      %95 = dma.done [#allocation6], 512
    $region53: #{tpu_custom_call.1} parent=1 // pred_fallthru
      _
    // Predicated region
    $region54: #{tpu_custom_call.1} parent=1 // pred_check
      _
    $region55: #{tpu_custom_call.1} parent=1 // pred_check_branch
      %97 = sbr.rel (0) target = $region57
    $region56: #{tpu_custom_call.1} parent=1 // pred_region
      %98 = dma.done [#allocation6], 512
    $region57: #{tpu_custom_call.1} parent=1 // pred_fallthru
      _
    // Predicated region
    $region58: #{tpu_custom_call.1} parent=1 // pred_check
      _
    $region59: #{tpu_custom_call.1} parent=1 // pred_check_branch
      %100 = sbr.rel (0) target = $region61
    $region60: #{tpu_custom_call.1} parent=1 // pred_region
      %101 = dma.done [#allocation9], 1536
    $region61: #{tpu_custom_call.1} parent=1 // pred_fallthru
      _
    // Predicated region
    $region62: #{tpu_custom_call.1} parent=1 // pred_check
      _
    $region63: #{tpu_custom_call.1} parent=1 // pred_check_branch
      %103 = sbr.rel (0) target = $region65
    $region64: #{tpu_custom_call.1} parent=1 // pred_region
      %104 = dma.done [#allocation9], 2048
    $region65: #{tpu_custom_call.1} parent=1 // pred_fallthru
      _
    %v105 = vld [vmem:[#allocation2] sm:$0x3]
    %v106 = vld [vmem:[%s3] sm:$0x3]
    %v107 = vld [vmem:[%s1] sm:$0x3]
    %v108 = vld [vmem:[#allocation5] sm:$0xff]
    %v109 = vld [vmem:[#allocation5 + $0x8] sm:$0xff]
    %v110 = vld [vmem:[#allocation5 + $0x10] sm:$0xff]
    %v111 = vld [vmem:[#allocation5 + $0x18] sm:$0x1f]
    %vm112 = vcmask 236544
    %v114 = vsel %vm112, %v107, 0
    %vm116 = vcmask 1044480
    %v118 = vsel %vm116, %v111, 0
    %120 = vmatprep.subr.mxu0 0.0
    %121 = vmatpush1.msra.mxu0 %v108
    %122 = vmatprep.subr.mxu0 0.0
    %123 = vmatpush1.msra.mxu0 %v109
    %124 = vmatprep.subr.mxu0 0.0
    %125 = vmatpush1.msra.mxu0 %v110
    %126 = vmatprep.subr.mxu0 0.0
    %127 = vmatpush1.msra.mxu0 %v118
    %128 = vmatprep.subr.mxu0 0.0
    %129 = vmatpush1.msra.mxu0 0.0
    %130 = vmatprep.subr.mxu0 0.0
    %131 = vmatpush1.msra.mxu0 0.0
    %132 = vmatprep.subr.mxu0 0.0
    %133 = vmatpush1.msra.mxu0 0.0
    %134 = vmatprep.subr.mxu0 0.0
    %135 = vmatpush1.msra.mxu0 0.0
    %136 = vmatprep.subr.mxu0 0.0
    %137 = vmatpush1.msra.mxu0 0.0
    %138 = vmatprep.subr.mxu0 0.0
    %139 = vmatpush1.msra.mxu0 0.0
    %140 = vmatprep.subr.mxu0 0.0
    %141 = vmatpush1.msra.mxu0 0.0
    %142 = vmatprep.subr.mxu0 0.0
    %143 = vmatpush1.msra.mxu0 0.0
    %144 = vmatprep.subr.mxu0 0.0
    %145 = vmatpush1.msra.mxu0 0.0
    %146 = vmatprep.subr.mxu0 0.0
    %147 = vmatpush1.msra.mxu0 0.0
    %148 = vmatprep.subr.mxu0 0.0
    %149 = vmatpush1.msra.mxu0 0.0
    %150 = vmatprep.subr.mxu0 0.0
    %151 = vmatpush1.msra.mxu0 0.0
    %152 = vmatprep.subr.mxu0 0.0
    %153 = vmatpush1.msra.mxu0 0.0
    %154 = vmatprep.subr.mxu0 0.0
    %155 = vmatpush1.msra.mxu0 0.0
    %156 = vmatprep.subr.mxu0 0.0
    %157 = vmatpush1.msra.mxu0 0.0
    %158 = vmatprep.subr.mxu0 0.0
    %159 = vmatpush1.msra.mxu0 0.0
    %160 = vmatprep.subr.mxu0 0.0
    %161 = vmatpush1.msra.mxu0 0.0
    %162 = vmatprep.subr.mxu0 0.0
    %163 = vmatpush1.msra.mxu0 0.0
    %164 = vmatprep.subr.mxu0 0.0
    %165 = vmatpush1.msra.mxu0 0.0
    %166 = vmatprep.subr.mxu0 0.0
    %167 = vmatpush1.msra.mxu0 0.0
    %168 = vmatprep.subr.mxu0 0.0
    %169 = vmatpush1.msra.mxu0 0.0
    %170 = vmatprep.subr.mxu0 0.0
    %171 = vmatpush1.msra.mxu0 0.0
    %172 = vmatprep.subr.mxu0 0.0
    %173 = vmatpush1.msra.mxu0 0.0
    %174 = vmatprep.subr.mxu0 0.0
    %175 = vmatpush1.msra.mxu0 0.0
    %176 = vmatprep.subr.mxu0 0.0
    %177 = vmatpush1.msra.mxu0 0.0
    %178 = vmatprep.subr.mxu0 0.0
    %179 = vmatpush1.msra.mxu0 0.0
    %180 = vmatprep.subr.mxu0 0.0
    %181 = vmatpush1.msra.mxu0 0.0
    %182 = vmatprep.subr.mxu0 0.0
    %183 = vmatpush1.msra.mxu0 0.0
    %184 = vmatprep.mubr.f32.mxu0 0.0
    %185 = vmatmul.mubr.f32.gmra.mrb[0].mxu0 %v114
    %v186 = vpop.f32.mrb[0].mxu0
    %v187 = vadd.f32 0.0, %v186
    %v188 = vpop.f32.mrb[0].mxu0
    %189 = vdwg.mxu0
    %vm190 = vcmask 15360
    %v192 = vsel %vm190, %v105, 0
    %vm194 = vcmask 1041408
    %v196 = vsel %vm194, %v106, 0
    %198 = vmatprep.subr.mxu0 0.0
    %199 = vmatpush1.msra.mxu0 %v196
    %200 = vmatprep.subr.mxu0 0.0
    %201 = vmatpush1.msra.mxu0 0.0
    %202 = vmatprep.subr.mxu0 0.0
    %203 = vmatpush1.msra.mxu0 0.0
    %204 = vmatprep.subr.mxu0 0.0
    %205 = vmatpush1.msra.mxu0 0.0
    %206 = vmatprep.subr.mxu0 0.0
    %207 = vmatpush1.msra.mxu0 0.0
    %208 = vmatprep.subr.mxu0 0.0
    %209 = vmatpush1.msra.mxu0 0.0
    %210 = vmatprep.subr.mxu0 0.0
    %211 = vmatpush1.msra.mxu0 0.0
    %212 = vmatprep.subr.mxu0 0.0
    %213 = vmatpush1.msra.mxu0 0.0
    %214 = vmatprep.subr.mxu0 0.0
    %215 = vmatpush1.msra.mxu0 0.0
    %216 = vmatprep.subr.mxu0 0.0
    %217 = vmatpush1.msra.mxu0 0.0
    %218 = vmatprep.subr.mxu0 0.0
    %219 = vmatpush1.msra.mxu0 0.0
    %220 = vmatprep.subr.mxu0 0.0
    %221 = vmatpush1.msra.mxu0 0.0
    %222 = vmatprep.subr.mxu0 0.0
    %223 = vmatpush1.msra.mxu0 0.0
    %224 = vmatprep.subr.mxu0 0.0
    %225 = vmatpush1.msra.mxu0 0.0
    %226 = vmatprep.subr.mxu0 0.0
    %227 = vmatpush1.msra.mxu0 0.0
    %228 = vmatprep.subr.mxu0 0.0
    %229 = vmatpush1.msra.mxu0 0.0
    %230 = vmatprep.subr.mxu0 0.0
    %231 = vmatpush1.msra.mxu0 0.0
    %232 = vmatprep.subr.mxu0 0.0
    %233 = vmatpush1.msra.mxu0 0.0
    %234 = vmatprep.subr.mxu0 0.0
    %235 = vmatpush1.msra.mxu0 0.0
    %236 = vmatprep.subr.mxu0 0.0
    %237 = vmatpush1.msra.mxu0 0.0
    %238 = vmatprep.subr.mxu0 0.0
    %239 = vmatpush1.msra.mxu0 0.0
    %240 = vmatprep.subr.mxu0 0.0
    %241 = vmatpush1.msra.mxu0 0.0
    %242 = vmatprep.subr.mxu0 0.0
    %243 = vmatpush1.msra.mxu0 0.0
    %244 = vmatprep.subr.mxu0 0.0
    %245 = vmatpush1.msra.mxu0 0.0
    %246 = vmatprep.subr.mxu0 0.0
    %247 = vmatpush1.msra.mxu0 0.0
    %248 = vmatprep.subr.mxu0 0.0
    %249 = vmatpush1.msra.mxu0 0.0
    %250 = vmatprep.subr.mxu0 0.0
    %251 = vmatpush1.msra.mxu0 0.0
    %252 = vmatprep.subr.mxu0 0.0
    %253 = vmatpush1.msra.mxu0 0.0
    %254 = vmatprep.subr.mxu0 0.0
    %255 = vmatpush1.msra.mxu0 0.0
    %256 = vmatprep.subr.mxu0 0.0
    %257 = vmatpush1.msra.mxu0 0.0
    %258 = vmatprep.subr.mxu0 0.0
    %259 = vmatpush1.msra.mxu0 0.0
    %260 = vmatprep.subr.mxu0 0.0
    %261 = vmatpush1.msra.mxu0 0.0
    %262 = vmatprep.mubr.f32.mxu0 0.0
    %263 = vmatmul.mubr.f32.gmra.mrb[0].mxu0 %v192
    %v264 = vpop.f32.mrb[0].mxu0
    %v265 = vadd.f32 %v187, %v264
    %v266 = vpop.f32.mrb[0].mxu0
    %267 = vdwg.mxu0
    %v268 = vld [vmem:[%s2] sm:$0x3]
    %v269 = vld [vmem:[#allocation7] sm:$0xff]
    %v270 = vld [vmem:[#allocation7 + $0x8] sm:$0xff]
    %v271 = vld [vmem:[#allocation7 + $0x10] sm:$0xff]
    %v272 = vld [vmem:[#allocation7 + $0x18] sm:$0x3f]
    %vm273 = vcmask 244736
    %v275 = vsel %vm273, %v268, 0
    %vm277 = vcmask 1045504
    %v279 = vsel %vm277, %v272, 0
    %281 = vmatprep.subr.mxu0 0.0
    %282 = vmatpush1.msra.mxu0 %v269
    %283 = vmatprep.subr.mxu0 0.0
    %284 = vmatpush1.msra.mxu0 %v270
    %285 = vmatprep.subr.mxu0 0.0
    %286 = vmatpush1.msra.mxu0 %v271
    %287 = vmatprep.subr.mxu0 0.0
    %288 = vmatpush1.msra.mxu0 %v279
    %289 = vmatprep.subr.mxu0 0.0
    %290 = vmatpush1.msra.mxu0 0.0
    %291 = vmatprep.subr.mxu0 0.0
    %292 = vmatpush1.msra.mxu0 0.0
    %293 = vmatprep.subr.mxu0 0.0
    %294 = vmatpush1.msra.mxu0 0.0
    %295 = vmatprep.subr.mxu0 0.0
    %296 = vmatpush1.msra.mxu0 0.0
    %297 = vmatprep.subr.mxu0 0.0
    %298 = vmatpush1.msra.mxu0 0.0
    %299 = vmatprep.subr.mxu0 0.0
    %300 = vmatpush1.msra.mxu0 0.0
    %301 = vmatprep.subr.mxu0 0.0
    %302 = vmatpush1.msra.mxu0 0.0
    %303 = vmatprep.subr.mxu0 0.0
    %304 = vmatpush1.msra.mxu0 0.0
    %305 = vmatprep.subr.mxu0 0.0
    %306 = vmatpush1.msra.mxu0 0.0
    %307 = vmatprep.subr.mxu0 0.0
    %308 = vmatpush1.msra.mxu0 0.0
    %309 = vmatprep.subr.mxu0 0.0
    %310 = vmatpush1.msra.mxu0 0.0
    %311 = vmatprep.subr.mxu0 0.0
    %312 = vmatpush1.msra.mxu0 0.0
    %313 = vmatprep.subr.mxu0 0.0
    %314 = vmatpush1.msra.mxu0 0.0
    %315 = vmatprep.subr.mxu0 0.0
    %316 = vmatpush1.msra.mxu0 0.0
    %317 = vmatprep.subr.mxu0 0.0
    %318 = vmatpush1.msra.mxu0 0.0
    %319 = vmatprep.subr.mxu0 0.0
    %320 = vmatpush1.msra.mxu0 0.0
    %321 = vmatprep.subr.mxu0 0.0
    %322 = vmatpush1.msra.mxu0 0.0
    %323 = vmatprep.subr.mxu0 0.0
    %324 = vmatpush1.msra.mxu0 0.0
    %325 = vmatprep.subr.mxu0 0.0
    %326 = vmatpush1.msra.mxu0 0.0
    %327 = vmatprep.subr.mxu0 0.0
    %328 = vmatpush1.msra.mxu0 0.0
    %329 = vmatprep.subr.mxu0 0.0
    %330 = vmatpush1.msra.mxu0 0.0
    %331 = vmatprep.subr.mxu0 0.0
    %332 = vmatpush1.msra.mxu0 0.0
    %333 = vmatprep.subr.mxu0 0.0
    %334 = vmatpush1.msra.mxu0 0.0
    %335 = vmatprep.subr.mxu0 0.0
    %336 = vmatpush1.msra.mxu0 0.0
    %337 = vmatprep.subr.mxu0 0.0
    %338 = vmatpush1.msra.mxu0 0.0
    %339 = vmatprep.subr.mxu0 0.0
    %340 = vmatpush1.msra.mxu0 0.0
    %341 = vmatprep.subr.mxu0 0.0
    %342 = vmatpush1.msra.mxu0 0.0
    %343 = vmatprep.subr.mxu0 0.0
    %344 = vmatpush1.msra.mxu0 0.0
    %345 = vmatprep.mubr.f32.mxu0 0.0
    %346 = vmatmul.mubr.f32.gmra.mrb[0].mxu0 %v275
    %v347 = vpop.f32.mrb[0].mxu0
    %v348 = vadd.f32 0.0, %v347
    %v349 = vpop.f32.mrb[0].mxu0
    %350 = vdwg.mxu0
    %v351 = vadd.f32 %v265, %v348
    %v352 = vld [vmem:[%s6] sm:$0x1]
    %v354 = vlaneseq
    %v355 = vshrl.u32 %v354, 7
    %v356 = vsub.s32 0, %v355
    %v357 = vrot.slane %v352, %v356
    %v359 = vadd.f32 %v351, %v357
    %v360 = vtanh.pop %v359
    %v361 = vld [vmem:[#allocation8] sm:$0xff]
    %v362 = vld [vmem:[#allocation8 + $0x8] sm:$0xff]
    %v363 = vld [vmem:[#allocation8 + $0x10] sm:$0xff]
    %v364 = vld [vmem:[#allocation8 + $0x18] sm:$0xff]
    %v365 = vld [vmem:[#allocation8 + $0x20] sm:$0xff]
    %v366 = vld [vmem:[#allocation8 + $0x28] sm:$0xff]
    %v367 = vld [vmem:[#allocation8 + $0x30] sm:$0xff]
    %v368 = vld [vmem:[#allocation8 + $0x38] sm:$0xff]
    %v369 = vld [vmem:[#allocation8 + $0x40] sm:$0xff]
    %v370 = vld [vmem:[#allocation8 + $0x48] sm:$0xff]
    %v371 = vld [vmem:[#allocation8 + $0x50] sm:$0xff]
    %v372 = vld [vmem:[#allocation8 + $0x58] sm:$0xff]
    %v373 = vld [vmem:[%s8] sm:$0x7]
    %v375 = vlaneseq
    %v376 = vshrl.u32 %v375, 7
    %v377 = vsub.s32 0, %v376
    %v378 = vrot.slane %v373, %v377
    %v379 = vlaneseq
    %v380 = vshrl.u32 %v379, 7
    %v381 = vsub.s32 1, %v380
    %v382 = vrot.slane %v373, %v381
    %v383 = vlaneseq
    %v384 = vshrl.u32 %v383, 7
    %v385 = vsub.s32 2, %v384
    %v386 = vrot.slane %v373, %v385
    %vm390 = vcmask 261120
    %v392 = vsel %vm390, %v360, 0
    %394 = vmatprep.subr.mxu0 %v362
    %395 = vmatpush1.msra.mxu0 %v361
    %396 = vmatprep.subr.mxu0 %v365
    %397 = vmatpush1.msra.mxu0 %v364
    %398 = vmatprep.subr.mxu0 %v368
    %399 = vmatpush1.msra.mxu0 %v367
    %400 = vmatprep.subr.mxu0 %v371
    %401 = vmatpush1.msra.mxu0 %v370
    %402 = vmatprep.subr.mxu0 0.0
    %403 = vmatpush1.msra.mxu0 0.0
    %404 = vmatprep.subr.mxu0 0.0
    %405 = vmatpush1.msra.mxu0 0.0
    %406 = vmatprep.subr.mxu0 0.0
    %407 = vmatpush1.msra.mxu0 0.0
    %408 = vmatprep.subr.mxu0 0.0
    %409 = vmatpush1.msra.mxu0 0.0
    %410 = vmatprep.subr.mxu0 0.0
    %411 = vmatpush1.msra.mxu0 0.0
    %412 = vmatprep.subr.mxu0 0.0
    %413 = vmatpush1.msra.mxu0 0.0
    %414 = vmatprep.subr.mxu0 0.0
    %415 = vmatpush1.msra.mxu0 0.0
    %416 = vmatprep.subr.mxu0 0.0
    %417 = vmatpush1.msra.mxu0 0.0
    %418 = vmatprep.subr.mxu0 0.0
    %419 = vmatpush1.msra.mxu0 0.0
    %420 = vmatprep.subr.mxu0 0.0
    %421 = vmatpush1.msra.mxu0 0.0
    %422 = vmatprep.subr.mxu0 0.0
    %423 = vmatpush1.msra.mxu0 0.0
    %424 = vmatprep.subr.mxu0 0.0
    %425 = vmatpush1.msra.mxu0 0.0
    %426 = vmatprep.subr.mxu0 0.0
    %427 = vmatpush1.msra.mxu0 0.0
    %428 = vmatprep.subr.mxu0 0.0
    %429 = vmatpush1.msra.mxu0 0.0
    %430 = vmatprep.subr.mxu0 0.0
    %431 = vmatpush1.msra.mxu0 0.0
    %432 = vmatprep.subr.mxu0 0.0
    %433 = vmatpush1.msra.mxu0 0.0
    %434 = vmatprep.subr.mxu0 0.0
    %435 = vmatpush1.msra.mxu0 0.0
    %436 = vmatprep.subr.mxu0 0.0
    %437 = vmatpush1.msra.mxu0 0.0
    %438 = vmatprep.subr.mxu0 0.0
    %439 = vmatpush1.msra.mxu0 0.0
    %440 = vmatprep.subr.mxu0 0.0
    %441 = vmatpush1.msra.mxu0 0.0
    %442 = vmatprep.subr.mxu0 0.0
    %443 = vmatpush1.msra.mxu0 0.0
    %444 = vmatprep.subr.mxu0 0.0
    %445 = vmatpush1.msra.mxu0 0.0
    %446 = vmatprep.subr.mxu0 0.0
    %447 = vmatpush1.msra.mxu0 0.0
    %448 = vmatprep.subr.mxu0 0.0
    %449 = vmatpush1.msra.mxu0 0.0
    %450 = vmatprep.subr.mxu0 0.0
    %451 = vmatpush1.msra.mxu0 0.0
    %452 = vmatprep.subr.mxu0 0.0
    %453 = vmatpush1.msra.mxu0 0.0
    %454 = vmatprep.subr.mxu0 0.0
    %455 = vmatpush1.msra.mxu0 0.0
    %456 = vmatprep.subr.mxu0 0.0
    %457 = vmatpush1.msra.mxu0 0.0
    %458 = vmatprep.mubr.f32.mxu0 0.0
    %459 = vmatmul.mubr.f32.gmra.mrb[0].mxu0 %v392
    %v460 = vpop.f32.mrb[0].mxu0
    %v461 = vadd.f32 %v378, %v460
    %v462 = vpop.f32.mrb[0].mxu0
    %v463 = vadd.f32 %v382, %v462
    %464 = vdwg.mxu0
    %465 = vmatprep.subr.mxu0 0.0
    %466 = vmatpush1.msra.mxu0 %v363
    %467 = vmatprep.subr.mxu0 0.0
    %468 = vmatpush1.msra.mxu0 %v366
    %469 = vmatprep.subr.mxu0 0.0
    %470 = vmatpush1.msra.mxu0 %v369
    %471 = vmatprep.subr.mxu0 0.0
    %472 = vmatpush1.msra.mxu0 %v372
    %473 = vmatprep.subr.mxu0 0.0
    %474 = vmatpush1.msra.mxu0 0.0
    %475 = vmatprep.subr.mxu0 0.0
    %476 = vmatpush1.msra.mxu0 0.0
    %477 = vmatprep.subr.mxu0 0.0
    %478 = vmatpush1.msra.mxu0 0.0
    %479 = vmatprep.subr.mxu0 0.0
    %480 = vmatpush1.msra.mxu0 0.0
    %481 = vmatprep.subr.mxu0 0.0
    %482 = vmatpush1.msra.mxu0 0.0
    %483 = vmatprep.subr.mxu0 0.0
    %484 = vmatpush1.msra.mxu0 0.0
    %485 = vmatprep.subr.mxu0 0.0
    %486 = vmatpush1.msra.mxu0 0.0
    %487 = vmatprep.subr.mxu0 0.0
    %488 = vmatpush1.msra.mxu0 0.0
    %489 = vmatprep.subr.mxu0 0.0
    %490 = vmatpush1.msra.mxu0 0.0
    %491 = vmatprep.subr.mxu0 0.0
    %492 = vmatpush1.msra.mxu0 0.0
    %493 = vmatprep.subr.mxu0 0.0
    %494 = vmatpush1.msra.mxu0 0.0
    %495 = vmatprep.subr.mxu0 0.0
    %496 = vmatpush1.msra.mxu0 0.0
    %497 = vmatprep.subr.mxu0 0.0
    %498 = vmatpush1.msra.mxu0 0.0
    %499 = vmatprep.subr.mxu0 0.0
    %500 = vmatpush1.msra.mxu0 0.0
    %501 = vmatprep.subr.mxu0 0.0
    %502 = vmatpush1.msra.mxu0 0.0
    %503 = vmatprep.subr.mxu0 0.0
    %504 = vmatpush1.msra.mxu0 0.0
    %505 = vmatprep.subr.mxu0 0.0
    %506 = vmatpush1.msra.mxu0 0.0
    %507 = vmatprep.subr.mxu0 0.0
    %508 = vmatpush1.msra.mxu0 0.0
    %509 = vmatprep.subr.mxu0 0.0
    %510 = vmatpush1.msra.mxu0 0.0
    %511 = vmatprep.subr.mxu0 0.0
    %512 = vmatpush1.msra.mxu0 0.0
    %513 = vmatprep.subr.mxu0 0.0
    %514 = vmatpush1.msra.mxu0 0.0
    %515 = vmatprep.subr.mxu0 0.0
    %516 = vmatpush1.msra.mxu0 0.0
    %517 = vmatprep.subr.mxu0 0.0
    %518 = vmatpush1.msra.mxu0 0.0
    %519 = vmatprep.subr.mxu0 0.0
    %520 = vmatpush1.msra.mxu0 0.0
    %521 = vmatprep.subr.mxu0 0.0
    %522 = vmatpush1.msra.mxu0 0.0
    %523 = vmatprep.subr.mxu0 0.0
    %524 = vmatpush1.msra.mxu0 0.0
    %525 = vmatprep.subr.mxu0 0.0
    %526 = vmatpush1.msra.mxu0 0.0
    %527 = vmatprep.subr.mxu0 0.0
    %528 = vmatpush1.msra.mxu0 0.0
    %529 = vmatprep.mubr.f32.mxu0 0.0
    %530 = vmatmul.mubr.f32.gmra.mrb[0].mxu0 %v392
    %v531 = vpop.f32.mrb[0].mxu0
    %v532 = vadd.f32 %v386, %v531
    %v533 = vpop.f32.mrb[0].mxu0
    %534 = vdwg.mxu0
    %v535 = vxor.u32 %v461, 2147483648
    %v536 = vmul.f32 %v535, 1.442695
    %v537 = vpow.pop %v536
    %v538 = vadd.f32 %v537, 1.0
    %v539 = vrcp.pop %v538
    %v540 = vmul.f32 1.0, %v539
    %v541 = vtanh.pop %v463
    %v542 = vxor.u32 %v532, 2147483648
    %v543 = vmul.f32 %v542, 1.442695
    %v544 = vpow.pop %v543
    %v545 = vadd.f32 %v544, 1.0
    %v546 = vrcp.pop %v545
    %v547 = vmul.f32 1.0, %v546
    %v548 = vmul.f32 %v540, %v541
    %v549 = vtanh.pop %v548
    %v550 = vmul.f32 %v547, %v549
    %v551 = vld [vmem:[#allocation10] sm:$0xff]
    %v552 = vld [vmem:[#allocation10 + $0x8] sm:$0xff]
    %v553 = vld [vmem:[#allocation10 + $0x10] sm:$0xff]
    %v554 = vld [vmem:[#allocation10 + $0x18] sm:$0xff]
    %v555 = vld [vmem:[#allocation10 + $0x20] sm:$0xff]
    %v556 = vld [vmem:[#allocation10 + $0x28] sm:$0xff]
    %v557 = vld [vmem:[#allocation10 + $0x30] sm:$0xff]
    %v558 = vld [vmem:[#allocation10 + $0x38] sm:$0xff]
    %v559 = vld [vmem:[#allocation10 + $0x40] sm:$0xff]
    %v560 = vld [vmem:[#allocation10 + $0x48] sm:$0xff]
    %v561 = vld [vmem:[#allocation10 + $0x50] sm:$0xff]
    %v562 = vld [vmem:[#allocation10 + $0x58] sm:$0xff]
    %v563 = vld [vmem:[#allocation10 + $0x60] sm:$0xff]
    %v564 = vld [vmem:[#allocation10 + $0x68] sm:$0xff]
    %v565 = vld [vmem:[#allocation10 + $0x70] sm:$0xff]
    %v566 = vld [vmem:[#allocation10 + $0x78] sm:$0xff]
    %v567 = vld [vmem:[%s10] sm:$0x1]
    %v569 = vlaneseq
    %v570 = vshrl.u32 %v569, 7
    %v571 = vsub.s32 0, %v570
    %v572 = vrot.slane %v567, %v571
    %574 = vmatprep.subr.mxu0 0.0
    %575 = vmatpush1.msra.mxu0 %v551
    %576 = vmatprep.subr.mxu0 0.0
    %577 = vmatpush1.msra.mxu0 %v552
    %578 = vmatprep.subr.mxu0 0.0
    %579 = vmatpush1.msra.mxu0 %v553
    %580 = vmatprep.subr.mxu0 0.0
    %581 = vmatpush1.msra.mxu0 %v554
    %582 = vmatprep.subr.mxu0 0.0
    %583 = vmatpush1.msra.mxu0 %v555
    %584 = vmatprep.subr.mxu0 0.0
    %585 = vmatpush1.msra.mxu0 %v556
    %586 = vmatprep.subr.mxu0 0.0
    %587 = vmatpush1.msra.mxu0 %v557
    %588 = vmatprep.subr.mxu0 0.0
    %589 = vmatpush1.msra.mxu0 %v558
    %590 = vmatprep.subr.mxu0 0.0
    %591 = vmatpush1.msra.mxu0 %v559
    %592 = vmatprep.subr.mxu0 0.0
    %593 = vmatpush1.msra.mxu0 %v560
    %594 = vmatprep.subr.mxu0 0.0
    %595 = vmatpush1.msra.mxu0 %v561
    %596 = vmatprep.subr.mxu0 0.0
    %597 = vmatpush1.msra.mxu0 %v562
    %598 = vmatprep.subr.mxu0 0.0
    %599 = vmatpush1.msra.mxu0 %v563
    %600 = vmatprep.subr.mxu0 0.0
    %601 = vmatpush1.msra.mxu0 %v564
    %602 = vmatprep.subr.mxu0 0.0
    %603 = vmatpush1.msra.mxu0 %v565
    %604 = vmatprep.subr.mxu0 0.0
    %605 = vmatpush1.msra.mxu0 %v566
    %606 = vmatprep.subr.mxu0 0.0
    %607 = vmatpush1.msra.mxu0 0.0
    %608 = vmatprep.subr.mxu0 0.0
    %609 = vmatpush1.msra.mxu0 0.0
    %610 = vmatprep.subr.mxu0 0.0
    %611 = vmatpush1.msra.mxu0 0.0
    %612 = vmatprep.subr.mxu0 0.0
    %613 = vmatpush1.msra.mxu0 0.0
    %614 = vmatprep.subr.mxu0 0.0
    %615 = vmatpush1.msra.mxu0 0.0
    %616 = vmatprep.subr.mxu0 0.0
    %617 = vmatpush1.msra.mxu0 0.0
    %618 = vmatprep.subr.mxu0 0.0
    %619 = vmatpush1.msra.mxu0 0.0
    %620 = vmatprep.subr.mxu0 0.0
    %621 = vmatpush1.msra.mxu0 0.0
    %622 = vmatprep.subr.mxu0 0.0
    %623 = vmatpush1.msra.mxu0 0.0
    %624 = vmatprep.subr.mxu0 0.0
    %625 = vmatpush1.msra.mxu0 0.0
    %626 = vmatprep.subr.mxu0 0.0
    %627 = vmatpush1.msra.mxu0 0.0
    %628 = vmatprep.subr.mxu0 0.0
    %629 = vmatpush1.msra.mxu0 0.0
    %630 = vmatprep.subr.mxu0 0.0
    %631 = vmatpush1.msra.mxu0 0.0
    %632 = vmatprep.subr.mxu0 0.0
    %633 = vmatpush1.msra.mxu0 0.0
    %634 = vmatprep.subr.mxu0 0.0
    %635 = vmatpush1.msra.mxu0 0.0
    %636 = vmatprep.subr.mxu0 0.0
    %637 = vmatpush1.msra.mxu0 0.0
    %638 = vmatprep.mubr.f32.mxu0 0.0
    %639 = vmatmul.mubr.f32.gmra.mrb[0].mxu0 %v550
    %v640 = vpop.f32.mrb[0].mxu0
    %v641 = vadd.f32 %v572, %v640
    %v642 = vpop.f32.mrb[0].mxu0
    %643 = vdwg.mxu0
    %644 = vst [vmem:[#allocation11] sm:$0x3] %v641
    // Predicated region
    $region66: #{tpu_custom_call.1} parent=1 // pred_check
      _
    $region67: #{tpu_custom_call.1} parent=1 // pred_check_branch
      %646 = sbr.rel (0) target = $region69
    $region68: #{tpu_custom_call.1} parent=1 // pred_region
      %s648 = ssub.s32 32, 32
      %649 = vsyncadd [#allocation4], %s648
      %s651 = sshll.u32 [#allocation11], 4
      %s652 = int_to_ptr.vmem [resolvable:$true] %s651
      %654 = dma.vmem_to_hbm [thread:$0]  %s652, 32, %s11, [#allocation4]
    $region69: #{tpu_custom_call.1} parent=1 // pred_fallthru
      _
    // Predicated region
    $region70: #{tpu_custom_call.1} parent=1 // pred_check
      _
    $region71: #{tpu_custom_call.1} parent=1 // pred_check_branch
      %656 = sbr.rel (0) target = $region73
    $region72: #{tpu_custom_call.1} parent=1 // pred_region
      %657 = dma.done [#allocation4], 32
    $region73: #{tpu_custom_call.1} parent=1 // pred_fallthru
      _
    %658 = vsyncpa [#allocation3], 1
    %659 = vsyncpa [#allocation6], 1
    %660 = vsyncpa [#allocation9], 1
    %661 = vsyncpa [#allocation4], 1

</llo_original>
